<compile_context>
chip_gen: v7x
topology: tpu7x:2x2x1
jax: 0.10.0
libtpu: 0.0.40
codegen_flags: <defaults>
</compile_context>

<pallas_src>
import functools

import jax
import jax.numpy as jnp
from jax import lax
from jax.experimental import pallas as pl
from jax.experimental.pallas import tpu as pltpu

LANE = 128
SUBLANE = 8
_VMEM_LIMIT = 48 * 1024 * 1024   # stays well under v7x's 64 MiB physical VMEM


def _round_up(x, m):
    return (x + m - 1) // m * m


# ---------------------------------------------------------------------------
# Kernel A: tanh-RNN recurrence (one grid step = one batch block x seq block).
# ---------------------------------------------------------------------------
def rnn_recurrence_kernel(x_ref, w_ref, b_ref, h_ref, *, seq_len):
    """x_ref : (t_blk, b_blk, emb_pad)              bf16  streamed tile
       w_ref : (emb_pad + hidden_pad, hidden_pad)   bf16  fused [W_ih; W_hh]
       b_ref : (1, hidden_pad)                      f32   pre-summed b_ih + b_hh
       h_ref : (b_blk, hidden_pad)                  f32   output block == hidden-state carry
    """
    t_idx = pl.program_id(1)
    t_blk = x_ref.shape[0]

    # h_0 = 0 (PyTorch default when no initial hidden state is given).
    @pl.when(t_idx == 0)
    def _():
        h_ref[...] = jnp.zeros_like(h_ref)

    h = h_ref[...]                     # (b_blk, hidden_pad) f32
    bias = b_ref[...]                  # loaded once per grid step (hoisted out of loop)
    base_t = t_idx * t_blk

    def step(t, h):
        x_t = x_ref[t]                                        # (b_blk, emb_pad) bf16
        xh = jnp.concatenate([x_t, h.astype(jnp.bfloat16)], axis=1)
        pre = jnp.dot(xh, w_ref[...], preferred_element_type=jnp.float32) + bias
        h_new = jnp.tanh(pre)
        # Mask padded tail timesteps (keeps h unchanged there).
        return jnp.where(base_t + t < seq_len, h_new, h)

    h = lax.fori_loop(0, t_blk, step, h, unroll=True)
    h_ref[...] = h


# ---------------------------------------------------------------------------
# Kernel B: final projection, tiled over the vocab (lane) dimension.
# ---------------------------------------------------------------------------
def projection_kernel(h_ref, w_ref, b_ref, out_ref):
    """h_ref   : (b_blk, hidden_pad)  f32
       w_ref   : (hidden_pad, n_blk)  bf16
       b_ref   : (1, n_blk)           f32
       out_ref : (b_blk, n_blk)       f32
    """
    h = h_ref[...].astype(jnp.bfloat16)
    out_ref[...] = (
        jnp.dot(h, w_ref[...], preferred_element_type=jnp.float32) + b_ref[...]
    )


# ---------------------------------------------------------------------------
# Wrapper
# ---------------------------------------------------------------------------
def textrnn_forward(tokens, params, *, t_blk=16, vocab_blk=512):
    """tokens: (batch, seq) int32.  Returns logits (batch, vocab) float32."""
    emb_table = params["embedding"]                  # (vocab, emb) f32
    w_ih, w_hh = params["w_ih"], params["w_hh"]      # (emb, hidden), (hidden, hidden)
    bias = params["b_ih"] + params["b_hh"]           # pre-summed, (1, hidden)
    w_out, b_out = params["w_out"], params["b_out"]  # (hidden, vocab), (1, vocab)

    batch, seq = tokens.shape
    emb = emb_table.shape[1]
    hidden = w_hh.shape[0]
    vocab = w_out.shape[1]

    # ---- hardware-friendly padded shapes ----------------------------------
    pad_emb = _round_up(emb, LANE)
    pad_hidden = _round_up(hidden, LANE)
    pad_vocab = _round_up(vocab, LANE)
    pad_batch = _round_up(batch, 2 * SUBLANE)        # 16 sublanes (bf16 packing)
    b_blk = pad_batch if pad_batch <= 256 else LANE
    pad_batch = _round_up(pad_batch, b_blk)

    t_blk = max(1, min(t_blk, seq))                  # timesteps per grid step
    pad_seq = _round_up(seq, t_blk)

    n_blk = min(_round_up(vocab_blk, LANE), pad_vocab)
    while pad_vocab % n_blk:                         # both multiples of 128 -> terminates
        n_blk -= LANE

    # ---- parameter / activation packing (layout glue, plain JAX) ----------
    # Gather in (seq, batch) token order == PyTorch's x.transpose(0, 1), so no
    # large-activation transpose is materialized.
    # TODO(synk): the embedding gather itself could move in-kernel via scalar
    # prefetched token ids + pl.Element index_map to avoid an HBM round trip.
    x = jnp.take(emb_table, tokens.T, axis=0).astype(jnp.bfloat16)   # (seq, batch, emb)
    x = jnp.pad(x, ((0, pad_seq - seq), (0, pad_batch - batch), (0, pad_emb - emb)))

    w_fused = jnp.zeros((pad_emb + pad_hidden, pad_hidden), jnp.float32)
    w_fused = w_fused.at[:emb, :hidden].set(w_ih)
    w_fused = w_fused.at[pad_emb:pad_emb + hidden, :hidden].set(w_hh)
    w_fused = w_fused.astype(jnp.bfloat16)

    bias_pad = jnp.zeros((1, pad_hidden), jnp.float32).at[:, :hidden].set(bias)
    w_out_pad = jnp.zeros((pad_hidden, pad_vocab), jnp.float32)
    w_out_pad = w_out_pad.at[:hidden, :vocab].set(w_out).astype(jnp.bfloat16)
    b_out_pad = jnp.zeros((1, pad_vocab), jnp.float32).at[:, :vocab].set(b_out)

    num_b = pad_batch // b_blk
    num_t = pad_seq // t_blk

    # ---- kernel A: recurrence ----------------------------------------------
    h_last = pl.pallas_call(
        functools.partial(rnn_recurrence_kernel, seq_len=seq),
        out_shape=jax.ShapeDtypeStruct((pad_batch, pad_hidden), jnp.float32),
        grid=(num_b, num_t),
        in_specs=[
            pl.BlockSpec((t_blk, b_blk, pad_emb), lambda b, t: (t, b, 0)),
            pl.BlockSpec((pad_emb + pad_hidden, pad_hidden), lambda b, t: (0, 0)),
            pl.BlockSpec((1, pad_hidden), lambda b, t: (0, 0)),
        ],
        out_specs=pl.BlockSpec((b_blk, pad_hidden), lambda b, t: (b, 0)),
        compiler_params=pltpu.CompilerParams(
            dimension_semantics=("parallel", "arbitrary"),
            vmem_limit_bytes=_VMEM_LIMIT),
    )(x, w_fused, bias_pad)

    # ---- kernel B: vocab projection (tiled over vocab) ---------------------
    logits_pad = pl.pallas_call(
        projection_kernel,
        out_shape=jax.ShapeDtypeStruct((pad_batch, pad_vocab), jnp.float32),
        grid=(num_b, pad_vocab // n_blk),
        in_specs=[
            pl.BlockSpec((b_blk, pad_hidden), lambda b, j: (b, 0)),
            pl.BlockSpec((pad_hidden, n_blk), lambda b, j: (0, j)),
            pl.BlockSpec((1, n_blk), lambda b, j: (0, j)),
        ],
        out_specs=pl.BlockSpec((b_blk, n_blk), lambda b, j: (b, j)),
        compiler_params=pltpu.CompilerParams(
            dimension_semantics=("parallel", "parallel"),
            vmem_limit_bytes=_VMEM_LIMIT),
    )(h_last, w_out_pad, b_out_pad)

    return logits_pad[:batch, :vocab]


# ---------------------------------------------------------------------------
# Parameters / reference
# ---------------------------------------------------------------------------
def init_params(key, vocab_size, embedding_size, hidden_size):
    """Deterministic synthetic parameters (shapes match the PyTorch module)."""
    k_emb, k_ih, k_hh, k_bih, k_bhh, k_w = jax.random.split(key, 6)
    scale = 1.0 / jnp.sqrt(hidden_size)
    return {
        # nn.Embedding(vocab, emb): weight (vocab, emb)
        "embedding": jax.random.normal(k_emb, (vocab_size, embedding_size), jnp.float32),
        # nn.RNN: weight_ih_l0 (hidden, emb) -> stored pre-transposed as (emb, hidden)
        "w_ih": jax.random.uniform(k_ih, (embedding_size, hidden_size), jnp.float32,
                                   -scale, scale),
        # weight_hh_l0 (hidden, hidden) -> pre-transposed (hidden, hidden)
        "w_hh": jax.random.uniform(k_hh, (hidden_size, hidden_size), jnp.float32,
                                   -scale, scale),
        "b_ih": jax.random.uniform(k_bih, (1, hidden_size), jnp.float32, -scale, scale),
        "b_hh": jax.random.uniform(k_bhh, (1, hidden_size), jnp.float32, -scale, scale),
        # nn.Linear(hidden, vocab, bias=False): weight (vocab, hidden) -> (hidden, vocab)
        "w_out": jax.random.uniform(k_w, (hidden_size, vocab_size), jnp.float32,
                                    -scale, scale),
        # self.B = nn.Parameter(torch.ones([vocab]))
        "b_out": jnp.ones((1, vocab_size), jnp.float32),
    }


def reference_forward(tokens, params):
    """Pure-JAX reference, matching the kernel's bf16-operand / f32-accum precision."""
    cast = lambda a: a.astype(jnp.bfloat16)
    x = jnp.take(params["embedding"], tokens.T, axis=0)   # (seq, batch, emb)
    batch = x.shape[1]
    hidden = params["w_hh"].shape[0]
    h0 = jnp.zeros((batch, hidden), jnp.float32)

    def step(h, x_t):
        pre = (jnp.dot(cast(x_t), cast(params["w_ih"]), preferred_element_type=jnp.float32)
               + jnp.dot(cast(h), cast(params["w_hh"]), preferred_element_type=jnp.float32)
               + params["b_ih"] + params["b_hh"])
        return jnp.tanh(pre), None

    h, _ = lax.scan(step, h0, x)
    return (jnp.dot(cast(h), cast(params["w_out"]), preferred_element_type=jnp.float32)
            + params["b_out"])


if __name__ == "__main__":
    vocab_size, embedding_size, hidden_size = 64, 16, 32
    batch, seq = 2, 8

    key = jax.random.PRNGKey(0)
    k_params, k_tok = jax.random.split(key)
    params = init_params(k_params, vocab_size, embedding_size, hidden_size)
    tokens = jax.random.randint(k_tok, (batch, seq), 0, vocab_size, dtype=jnp.int32)

    logits = jax.jit(textrnn_forward)(tokens, params)
    logits = jax.block_until_ready(logits)

    ref = reference_forward(tokens, params)
    assert logits.shape == (batch, vocab_size)
    assert jnp.allclose(logits, ref, atol=1e-2, rtol=1e-2), (
        "mismatch vs JAX reference, max abs diff = "
        f"{float(jnp.max(jnp.abs(logits - ref)))}")

    print("KERNEL_OK")
</pallas_src>

<mosaic_0001>
module attributes {stable_mosaic.version = 11 : i64} {
  func.func @projection_kernel(%arg0: i32, %arg1: i32, %arg2: memref<16x128xf32, #tpu.memory_space<vmem>>, %arg3: memref<128x128xbf16, #tpu.memory_space<vmem>>, %arg4: memref<1x128xf32, #tpu.memory_space<vmem>>, %arg5: memref<16x128xf32, #tpu.memory_space<vmem>>) attributes {dimension_semantics = [#tpu.dimension_semantics<parallel>, #tpu.dimension_semantics<parallel>], iteration_bounds = array<i64: 1, 1>, scalar_prefetch = 0 : i64, scratch_operands = 0 : i64, tpu.core_type = #tpu.core_type<tc>, window_params = [{transform_indices = @transform_0, window_bounds = array<i64: 16, 128>}, {transform_indices = @transform_1, window_bounds = array<i64: 128, 128>}, {transform_indices = @transform_2, window_bounds = array<i64: 1, 128>}, {transform_indices = @transform_3, window_bounds = array<i64: 16, 128>}]} {
    %c0 = arith.constant 0 : index
    %c0_0 = arith.constant 0 : index
    %0 = vector.load %arg2[%c0, %c0_0] : memref<16x128xf32, #tpu.memory_space<vmem>>, vector<16x128xf32>
    %1 = arith.truncf %0 : vector<16x128xf32> to vector<16x128xbf16>
    %c0_1 = arith.constant 0 : index
    %c0_2 = arith.constant 0 : index
    %2 = vector.load %arg3[%c0_1, %c0_2] : memref<128x128xbf16, #tpu.memory_space<vmem>>, vector<128x128xbf16>
    %cst = arith.constant dense<0.000000e+00> : vector<16x128xf32>
    %3 = tpu.matmul %1, %2, %cst {dimension_numbers = #tpu.dot_dimension_numbers<[1], [0], [0], [1], [0, 0, 1, 1], [], []>} : vector<16x128xbf16>, vector<128x128xbf16>, vector<16x128xf32> -> vector<16x128xf32>
    %c0_3 = arith.constant 0 : index
    %c0_4 = arith.constant 0 : index
    %4 = vector.load %arg4[%c0_3, %c0_4] : memref<1x128xf32, #tpu.memory_space<vmem>>, vector<1x128xf32>
    %5 = vector.broadcast %4 : vector<1x128xf32> to vector<16x128xf32>
    %6 = arith.addf %3, %5 : vector<16x128xf32>
    %c0_5 = arith.constant 0 : index
    %c0_6 = arith.constant 0 : index
    %7 = vector.load %arg5[%c0_5, %c0_6] : memref<16x128xf32, #tpu.memory_space<vmem>>, vector<16x128xf32>
    tpu.vector_store %arg5[%c0_5, %c0_6], %6 {strides = array<i32>} : memref<16x128xf32, #tpu.memory_space<vmem>>, vector<16x128xf32>,
    return
  }
  func.func @transform_0(%arg0: i32, %arg1: i32) -> (i32, i32) {
    %c0_i32 = arith.constant 0 : i32
    %c0_i32_0 = arith.constant 0 : i32
    return %arg0, %c0_i32 : i32, i32
  }
  func.func @transform_1(%arg0: i32, %arg1: i32) -> (i32, i32) {
    %c0_i32 = arith.constant 0 : i32
    %c0_i32_0 = arith.constant 0 : i32
    return %c0_i32, %arg1 : i32, i32
  }
  func.func @transform_2(%arg0: i32, %arg1: i32) -> (i32, i32) {
    %c0_i32 = arith.constant 0 : i32
    %c0_i32_0 = arith.constant 0 : i32
    return %c0_i32, %arg1 : i32, i32
  }
  func.func @transform_3(%arg0: i32, %arg1: i32) -> (i32, i32) {
    %c0_i32 = arith.constant 0 : i32
    return %arg0, %arg1 : i32, i32
  }
}

module attributes {stable_mosaic.version = 11 : i64} {
  func.func @rnn_recurrence_kernel(%arg0: i32, %arg1: i32, %arg2: memref<8x16x128xbf16, #tpu.memory_space<vmem>>, %arg3: memref<256x128xbf16, #tpu.memory_space<vmem>>, %arg4: memref<1x128xf32, #tpu.memory_space<vmem>>, %arg5: memref<16x128xf32, #tpu.memory_space<vmem>>) attributes {dimension_semantics = [#tpu.dimension_semantics<parallel>, #tpu.dimension_semantics<arbitrary>], iteration_bounds = array<i64: 1, 1>, scalar_prefetch = 0 : i64, scratch_operands = 0 : i64, tpu.core_type = #tpu.core_type<tc>, window_params = [{transform_indices = @transform_0, window_bounds = array<i64: 8, 16, 128>}, {pipeline_mode = #tpu.pipeline_mode<synchronous>, transform_indices = @transform_1, window_bounds = array<i64: 256, 128>}, {pipeline_mode = #tpu.pipeline_mode<synchronous>, transform_indices = @transform_2, window_bounds = array<i64: 1, 128>}, {transform_indices = @transform_3, window_bounds = array<i64: 16, 128>}]} {
    %c0_i32 = arith.constant 0 : i32
    %0 = arith.cmpi eq, %arg1, %c0_i32 : i32
    %1 = arith.extui %0 : i1 to i32
    %c0_i32_0 = arith.constant 0 : i32
    %2 = arith.cmpi ne, %1, %c0_i32_0 : i32
    scf.if %2 {
      %cst_55 = arith.constant 0.000000e+00 : f32
      %111 = vector.broadcast %cst_55 : f32 to vector<16x128xf32>
      %c0_56 = arith.constant 0 : index
      %c0_57 = arith.constant 0 : index
      %112 = vector.load %arg5[%c0_56, %c0_57] : memref<16x128xf32, #tpu.memory_space<vmem>>, vector<16x128xf32>
      tpu.vector_store %arg5[%c0_56, %c0_57], %111 {strides = array<i32>} : memref<16x128xf32, #tpu.memory_space<vmem>>, vector<16x128xf32>,
    } else {
    }
    %c0 = arith.constant 0 : index
    %c0_1 = arith.constant 0 : index
    %3 = vector.load %arg5[%c0, %c0_1] : memref<16x128xf32, #tpu.memory_space<vmem>>, vector<16x128xf32>
    %c0_2 = arith.constant 0 : index
    %c0_3 = arith.constant 0 : index
    %4 = vector.load %arg4[%c0_2, %c0_3] : memref<1x128xf32, #tpu.memory_space<vmem>>, vector<1x128xf32>
    %c8_i32 = arith.constant 8 : i32
    %5 = arith.muli %arg1, %c8_i32 : i32
    %c0_i32_4 = arith.constant 0 : i32
    %6 = arith.index_cast %c0_i32_4 : i32 to index
    %c0_5 = arith.constant 0 : index
    %c0_6 = arith.constant 0 : index
    %7 = vector.load %arg2[%6, %c0_5, %c0_6] : memref<8x16x128xbf16, #tpu.memory_space<vmem>>, vector<1x16x128xbf16>
    %8 = vector.shape_cast %7 : vector<1x16x128xbf16> to vector<16x128xbf16>
    %9 = arith.truncf %3 : vector<16x128xf32> to vector<16x128xbf16>
    %10 = tpu.concatenate %8, %9 in 1 : vector<16x128xbf16>, vector<16x128xbf16> -> vector<16x256xbf16>
    %c0_7 = arith.constant 0 : index
    %c0_8 = arith.constant 0 : index
    %11 = vector.load %arg3[%c0_7, %c0_8] : memref<256x128xbf16, #tpu.memory_space<vmem>>, vector<256x128xbf16>
    %cst = arith.constant dense<0.000000e+00> : vector<16x128xf32>
    %12 = tpu.matmul %10, %11, %cst {dimension_numbers = #tpu.dot_dimension_numbers<[1], [0], [0], [1], [0, 0, 1, 1], [], []>} : vector<16x256xbf16>, vector<256x128xbf16>, vector<16x128xf32> -> vector<16x128xf32>
    %13 = vector.broadcast %4 : vector<1x128xf32> to vector<16x128xf32>
    %14 = arith.addf %12, %13 : vector<16x128xf32>
    %15 = math.tanh %14 : vector<16x128xf32>
    %16 = arith.addi %5, %c0_i32_4 : i32
    %c8_i32_9 = arith.constant 8 : i32
    %17 = arith.cmpi slt, %16, %c8_i32_9 : i32
    %18 = arith.select %17, %15, %3 : vector<16x128xf32>
    %c1_i32 = arith.constant 1 : i32
    %19 = arith.index_cast %c1_i32 : i32 to index
    %c0_10 = arith.constant 0 : index
    %c0_11 = arith.constant 0 : index
    %20 = vector.load %arg2[%19, %c0_10, %c0_11] : memref<8x16x128xbf16, #tpu.memory_space<vmem>>, vector<1x16x128xbf16>
    %21 = vector.shape_cast %20 : vector<1x16x128xbf16> to vector<16x128xbf16>
    %22 = arith.truncf %18 : vector<16x128xf32> to vector<16x128xbf16>
    %23 = tpu.concatenate %21, %22 in 1 : vector<16x128xbf16>, vector<16x128xbf16> -> vector<16x256xbf16>
    %c0_12 = arith.constant 0 : index
    %c0_13 = arith.constant 0 : index
    %24 = vector.load %arg3[%c0_12, %c0_13] : memref<256x128xbf16, #tpu.memory_space<vmem>>, vector<256x128xbf16>
    %cst_14 = arith.constant dense<0.000000e+00> : vector<16x128xf32>
    %25 = tpu.matmul %23, %24, %cst_14 {dimension_numbers = #tpu.dot_dimension_numbers<[1], [0], [0], [1], [0, 0, 1, 1], [], []>} : vector<16x256xbf16>, vector<256x128xbf16>, vector<16x128xf32> -> vector<16x128xf32>
    %26 = vector.broadcast %4 : vector<1x128xf32> to vector<16x128xf32>
    %27 = arith.addf %25, %26 : vector<16x128xf32>
    %28 = math.tanh %27 : vector<16x128xf32>
    %29 = arith.addi %5, %c1_i32 : i32
    %c8_i32_15 = arith.constant 8 : i32
    %30 = arith.cmpi slt, %29, %c8_i32_15 : i32
    %31 = arith.select %30, %28, %18 : vector<16x128xf32>
    %c2_i32 = arith.constant 2 : i32
    %32 = arith.index_cast %c2_i32 : i32 to index
    %c0_16 = arith.constant 0 : index
    %c0_17 = arith.constant 0 : index
    %33 = vector.load %arg2[%32, %c0_16, %c0_17] : memref<8x16x128xbf16, #tpu.memory_space<vmem>>, vector<1x16x128xbf16>
    %34 = vector.shape_cast %33 : vector<1x16x128xbf16> to vector<16x128xbf16>
    %35 = arith.truncf %31 : vector<16x128xf32> to vector<16x128xbf16>
    %36 = tpu.concatenate %34, %35 in 1 : vector<16x128xbf16>, vector<16x128xbf16> -> vector<16x256xbf16>
    %c0_18 = arith.constant 0 : index
    %c0_19 = arith.constant 0 : index
    %37 = vector.load %arg3[%c0_18, %c0_19] : memref<256x128xbf16, #tpu.memory_space<vmem>>, vector<256x128xbf16>
    %cst_20 = arith.constant dense<0.000000e+00> : vector<16x128xf32>
    %38 = tpu.matmul %36, %37, %cst_20 {dimension_numbers = #tpu.dot_dimension_numbers<[1], [0], [0], [1], [0, 0, 1, 1], [], []>} : vector<16x256xbf16>, vector<256x128xbf16>, vector<16x128xf32> -> vector<16x128xf32>
    %39 = vector.broadcast %4 : vector<1x128xf32> to vector<16x128xf32>
    %40 = arith.addf %38, %39 : vector<16x128xf32>
    %41 = math.tanh %40 : vector<16x128xf32>
    %42 = arith.addi %5, %c2_i32 : i32
    %c8_i32_21 = arith.constant 8 : i32
    %43 = arith.cmpi slt, %42, %c8_i32_21 : i32
    %44 = arith.select %43, %41, %31 : vector<16x128xf32>
    %c3_i32 = arith.constant 3 : i32
    %45 = arith.index_cast %c3_i32 : i32 to index
    %c0_22 = arith.constant 0 : index
    %c0_23 = arith.constant 0 : index
    %46 = vector.load %arg2[%45, %c0_22, %c0_23] : memref<8x16x128xbf16, #tpu.memory_space<vmem>>, vector<1x16x128xbf16>
    %47 = vector.shape_cast %46 : vector<1x16x128xbf16> to vector<16x128xbf16>
    %48 = arith.truncf %44 : vector<16x128xf32> to vector<16x128xbf16>
    %49 = tpu.concatenate %47, %48 in 1 : vector<16x128xbf16>, vector<16x128xbf16> -> vector<16x256xbf16>
    %c0_24 = arith.constant 0 : index
    %c0_25 = arith.constant 0 : index
    %50 = vector.load %arg3[%c0_24, %c0_25] : memref<256x128xbf16, #tpu.memory_space<vmem>>, vector<256x128xbf16>
    %cst_26 = arith.constant dense<0.000000e+00> : vector<16x128xf32>
    %51 = tpu.matmul %49, %50, %cst_26 {dimension_numbers = #tpu.dot_dimension_numbers<[1], [0], [0], [1], [0, 0, 1, 1], [], []>} : vector<16x256xbf16>, vector<256x128xbf16>, vector<16x128xf32> -> vector<16x128xf32>
    %52 = vector.broadcast %4 : vector<1x128xf32> to vector<16x128xf32>
    %53 = arith.addf %51, %52 : vector<16x128xf32>
    %54 = math.tanh %53 : vector<16x128xf32>
    %55 = arith.addi %5, %c3_i32 : i32
    %c8_i32_27 = arith.constant 8 : i32
    %56 = arith.cmpi slt, %55, %c8_i32_27 : i32
    %57 = arith.select %56, %54, %44 : vector<16x128xf32>
    %c4_i32 = arith.constant 4 : i32
    %58 = arith.index_cast %c4_i32 : i32 to index
    %c0_28 = arith.constant 0 : index
    %c0_29 = arith.constant 0 : index
    %59 = vector.load %arg2[%58, %c0_28, %c0_29] : memref<8x16x128xbf16, #tpu.memory_space<vmem>>, vector<1x16x128xbf16>
    %60 = vector.shape_cast %59 : vector<1x16x128xbf16> to vector<16x128xbf16>
    %61 = arith.truncf %57 : vector<16x128xf32> to vector<16x128xbf16>
    %62 = tpu.concatenate %60, %61 in 1 : vector<16x128xbf16>, vector<16x128xbf16> -> vector<16x256xbf16>
    %c0_30 = arith.constant 0 : index
    %c0_31 = arith.constant 0 : index
    %63 = vector.load %arg3[%c0_30, %c0_31] : memref<256x128xbf16, #tpu.memory_space<vmem>>, vector<256x128xbf16>
    %cst_32 = arith.constant dense<0.000000e+00> : vector<16x128xf32>
    %64 = tpu.matmul %62, %63, %cst_32 {dimension_numbers = #tpu.dot_dimension_numbers<[1], [0], [0], [1], [0, 0, 1, 1], [], []>} : vector<16x256xbf16>, vector<256x128xbf16>, vector<16x128xf32> -> vector<16x128xf32>
    %65 = vector.broadcast %4 : vector<1x128xf32> to vector<16x128xf32>
    %66 = arith.addf %64, %65 : vector<16x128xf32>
    %67 = math.tanh %66 : vector<16x128xf32>
    %68 = arith.addi %5, %c4_i32 : i32
    %c8_i32_33 = arith.constant 8 : i32
    %69 = arith.cmpi slt, %68, %c8_i32_33 : i32
    %70 = arith.select %69, %67, %57 : vector<16x128xf32>
    %c5_i32 = arith.constant 5 : i32
    %71 = arith.index_cast %c5_i32 : i32 to index
    %c0_34 = arith.constant 0 : index
    %c0_35 = arith.constant 0 : index
    %72 = vector.load %arg2[%71, %c0_34, %c0_35] : memref<8x16x128xbf16, #tpu.memory_space<vmem>>, vector<1x16x128xbf16>
    %73 = vector.shape_cast %72 : vector<1x16x128xbf16> to vector<16x128xbf16>
    %74 = arith.truncf %70 : vector<16x128xf32> to vector<16x128xbf16>
    %75 = tpu.concatenate %73, %74 in 1 : vector<16x128xbf16>, vector<16x128xbf16> -> vector<16x256xbf16>
    %c0_36 = arith.constant 0 : index
    %c0_37 = arith.constant 0 : index
    %76 = vector.load %arg3[%c0_36, %c0_37] : memref<256x128xbf16, #tpu.memory_space<vmem>>, vector<256x128xbf16>
    %cst_38 = arith.constant dense<0.000000e+00> : vector<16x128xf32>
    %77 = tpu.matmul %75, %76, %cst_38 {dimension_numbers = #tpu.dot_dimension_numbers<[1], [0], [0], [1], [0, 0, 1, 1], [], []>} : vector<16x256xbf16>, vector<256x128xbf16>, vector<16x128xf32> -> vector<16x128xf32>
    %78 = vector.broadcast %4 : vector<1x128xf32> to vector<16x128xf32>
    %79 = arith.addf %77, %78 : vector<16x128xf32>
    %80 = math.tanh %79 : vector<16x128xf32>
    %81 = arith.addi %5, %c5_i32 : i32
    %c8_i32_39 = arith.constant 8 : i32
    %82 = arith.cmpi slt, %81, %c8_i32_39 : i32
    %83 = arith.select %82, %80, %70 : vector<16x128xf32>
    %c6_i32 = arith.constant 6 : i32
    %84 = arith.index_cast %c6_i32 : i32 to index
    %c0_40 = arith.constant 0 : index
    %c0_41 = arith.constant 0 : index
    %85 = vector.load %arg2[%84, %c0_40, %c0_41] : memref<8x16x128xbf16, #tpu.memory_space<vmem>>, vector<1x16x128xbf16>
    %86 = vector.shape_cast %85 : vector<1x16x128xbf16> to vector<16x128xbf16>
    %87 = arith.truncf %83 : vector<16x128xf32> to vector<16x128xbf16>
    %88 = tpu.concatenate %86, %87 in 1 : vector<16x128xbf16>, vector<16x128xbf16> -> vector<16x256xbf16>
    %c0_42 = arith.constant 0 : index
    %c0_43 = arith.constant 0 : index
    %89 = vector.load %arg3[%c0_42, %c0_43] : memref<256x128xbf16, #tpu.memory_space<vmem>>, vector<256x128xbf16>
    %cst_44 = arith.constant dense<0.000000e+00> : vector<16x128xf32>
    %90 = tpu.matmul %88, %89, %cst_44 {dimension_numbers = #tpu.dot_dimension_numbers<[1], [0], [0], [1], [0, 0, 1, 1], [], []>} : vector<16x256xbf16>, vector<256x128xbf16>, vector<16x128xf32> -> vector<16x128xf32>
    %91 = vector.broadcast %4 : vector<1x128xf32> to vector<16x128xf32>
    %92 = arith.addf %90, %91 : vector<16x128xf32>
    %93 = math.tanh %92 : vector<16x128xf32>
    %94 = arith.addi %5, %c6_i32 : i32
    %c8_i32_45 = arith.constant 8 : i32
    %95 = arith.cmpi slt, %94, %c8_i32_45 : i32
    %96 = arith.select %95, %93, %83 : vector<16x128xf32>
    %c7_i32 = arith.constant 7 : i32
    %97 = arith.index_cast %c7_i32 : i32 to index
    %c0_46 = arith.constant 0 : index
    %c0_47 = arith.constant 0 : index
    %98 = vector.load %arg2[%97, %c0_46, %c0_47] : memref<8x16x128xbf16, #tpu.memory_space<vmem>>, vector<1x16x128xbf16>
    %99 = vector.shape_cast %98 : vector<1x16x128xbf16> to vector<16x128xbf16>
    %100 = arith.truncf %96 : vector<16x128xf32> to vector<16x128xbf16>
    %101 = tpu.concatenate %99, %100 in 1 : vector<16x128xbf16>, vector<16x128xbf16> -> vector<16x256xbf16>
    %c0_48 = arith.constant 0 : index
    %c0_49 = arith.constant 0 : index
    %102 = vector.load %arg3[%c0_48, %c0_49] : memref<256x128xbf16, #tpu.memory_space<vmem>>, vector<256x128xbf16>
    %cst_50 = arith.constant dense<0.000000e+00> : vector<16x128xf32>
    %103 = tpu.matmul %101, %102, %cst_50 {dimension_numbers = #tpu.dot_dimension_numbers<[1], [0], [0], [1], [0, 0, 1, 1], [], []>} : vector<16x256xbf16>, vector<256x128xbf16>, vector<16x128xf32> -> vector<16x128xf32>
    %104 = vector.broadcast %4 : vector<1x128xf32> to vector<16x128xf32>
    %105 = arith.addf %103, %104 : vector<16x128xf32>
    %106 = math.tanh %105 : vector<16x128xf32>
    %107 = arith.addi %5, %c7_i32 : i32
    %c8_i32_51 = arith.constant 8 : i32
    %108 = arith.cmpi slt, %107, %c8_i32_51 : i32
    %109 = arith.select %108, %106, %96 : vector<16x128xf32>
    %c8_i32_52 = arith.constant 8 : i32
    %c0_53 = arith.constant 0 : index
    %c0_54 = arith.constant 0 : index
    %110 = vector.load %arg5[%c0_53, %c0_54] : memref<16x128xf32, #tpu.memory_space<vmem>>, vector<16x128xf32>
    tpu.vector_store %arg5[%c0_53, %c0_54], %109 {strides = array<i32>} : memref<16x128xf32, #tpu.memory_space<vmem>>, vector<16x128xf32>,
    return
  }
  func.func @transform_0(%arg0: i32, %arg1: i32) -> (i32, i32, i32) {
    %c0_i32 = arith.constant 0 : i32
    %c0_i32_0 = arith.constant 0 : i32
    return %arg1, %arg0, %c0_i32 : i32, i32, i32
  }
  func.func @transform_1(%arg0: i32, %arg1: i32) -> (i32, i32) {
    %c0_i32 = arith.constant 0 : i32
    %c0_i32_0 = arith.constant 0 : i32
    %c0_i32_1 = arith.constant 0 : i32
    return %c0_i32, %c0_i32_0 : i32, i32
  }
  func.func @transform_2(%arg0: i32, %arg1: i32) -> (i32, i32) {
    %c0_i32 = arith.constant 0 : i32
    %c0_i32_0 = arith.constant 0 : i32
    %c0_i32_1 = arith.constant 0 : i32
    return %c0_i32, %c0_i32_0 : i32, i32
  }
  func.func @transform_3(%arg0: i32, %arg1: i32) -> (i32, i32) {
    %c0_i32 = arith.constant 0 : i32
    %c0_i32_0 = arith.constant 0 : i32
    return %arg0, %c0_i32 : i32, i32
  }
}

</mosaic_0001>

<llo_original>
// kernel: textrnn_forward.3
$region0: #{textrnn_forward.3}
  #allocation0 [shape = 'u32[]', space=smem, size = 0x4, offset = 0x4, fixed_abs, tag = 'smem constant byte address 0x4 - core index']
  #allocation1 [shape = 'u32[144,128]{1,0:T(1,128)}', space=vmem, size = 0x12000, scoped, tag = 'internal scratch']
  %s0 = inlined_call_operand.vmem [shape: f32[16,128], index: 0, kind: input, shape index: {}]
  %s1 = inlined_call_operand.vmem [shape: bf16[128,128], index: 1, kind: input, shape index: {}]
  %s2 = inlined_call_operand.vmem [shape: f32[1,128], index: 2, kind: input, shape index: {}]
  %s3 = inlined_call_operand.vmem [shape: f32[16,128], index: 3, kind: output, shape index: {}]
  %s4 = sld [smem:[#allocation0]]
  $region22: #{textrnn_forward.3} parent=0
    _
  %s6 = ssub.s32 1, %s4
  %s7 = scalar_select 0, %s6, %s4
  // Predicated region
  $region2: #{textrnn_forward.3} parent=0 // pred_check
    _
  $region3: #{textrnn_forward.3} parent=0 // pred_check_branch
    %9 = sbr.rel (0) target = $region5
  $region4: #{textrnn_forward.3} parent=0 // pred_region
    _
  $region5: #{textrnn_forward.3} parent=0 // pred_fallthru
    _
  // Predicated region
  $region6: #{textrnn_forward.3} parent=0 // pred_check
    _
  $region7: #{textrnn_forward.3} parent=0 // pred_check_branch
    %11 = sbr.rel (0) target = $region9
  $region8: #{textrnn_forward.3} parent=0 // pred_region
    _
  $region9: #{textrnn_forward.3} parent=0 // pred_fallthru
    _
  // Predicated region
  $region10: #{textrnn_forward.3} parent=0 // pred_check
    _
  $region11: #{textrnn_forward.3} parent=0 // pred_check_branch
    %13 = sbr.rel (0) target = $region13
  $region12: #{textrnn_forward.3} parent=0 // pred_region
    _
  $region13: #{textrnn_forward.3} parent=0 // pred_fallthru
    _
  %v15 = vld [vmem:[%s0] sm:$0xff]
  %v16 = vld [vmem:[%s0 + $0x8] sm:$0xff]
  %v17 = vpack.c.bf16 %v16, %v15
  %v18 = vld [vmem:[%s1] sm:$0xf]
  %v19 = vld [vmem:[%s1 + $0x4] sm:$0xf]
  %v20 = vld [vmem:[%s1 + $0x8] sm:$0xf]
  %v21 = vld [vmem:[%s1 + $0xc] sm:$0xf]
  %v22 = vld [vmem:[%s1 + $0x10] sm:$0xf]
  %v23 = vld [vmem:[%s1 + $0x14] sm:$0xf]
  %v24 = vld [vmem:[%s1 + $0x18] sm:$0xf]
  %v25 = vld [vmem:[%s1 + $0x1c] sm:$0xf]
  %v26 = vld [vmem:[%s1 + $0x20] sm:$0xf]
  %v27 = vld [vmem:[%s1 + $0x24] sm:$0xf]
  %v28 = vld [vmem:[%s1 + $0x28] sm:$0xf]
  %v29 = vld [vmem:[%s1 + $0x2c] sm:$0xf]
  %v30 = vld [vmem:[%s1 + $0x30] sm:$0xf]
  %v31 = vld [vmem:[%s1 + $0x34] sm:$0xf]
  %v32 = vld [vmem:[%s1 + $0x38] sm:$0xf]
  %v33 = vld [vmem:[%s1 + $0x3c] sm:$0xf]
  %v34 = vld [vmem:[%s2] sm:$0x1]
  %v36 = vlaneseq
  %v37 = vshrl.u32 %v36, 7
  %v38 = vsub.s32 0, %v37
  %v39 = vrot.slane %v34, %v38
  %v57 = vunpack.c.l.b16 %v18
  %v58 = vunpack.c.l.b16 %v19
  %v59 = vunpack.c.l.b16 %v20
  %v60 = vunpack.c.l.b16 %v21
  %v61 = vunpack.c.l.b16 %v22
  %v62 = vunpack.c.l.b16 %v23
  %v63 = vunpack.c.l.b16 %v24
  %v64 = vunpack.c.l.b16 %v25
  %v65 = vunpack.c.l.b16 %v26
  %v66 = vunpack.c.l.b16 %v27
  %v67 = vunpack.c.l.b16 %v28
  %v68 = vunpack.c.l.b16 %v29
  %v69 = vunpack.c.l.b16 %v30
  %v70 = vunpack.c.l.b16 %v31
  %v71 = vunpack.c.l.b16 %v32
  %v72 = vunpack.c.l.b16 %v33
  %v73 = vpack.c.b16 %v58, %v57
  %v74 = vpack.c.b16 %v60, %v59
  %v75 = vpack.c.b16 %v62, %v61
  %v76 = vpack.c.b16 %v64, %v63
  %v77 = vpack.c.b16 %v66, %v65
  %v78 = vpack.c.b16 %v68, %v67
  %v79 = vpack.c.b16 %v70, %v69
  %v80 = vpack.c.b16 %v72, %v71
  %89 = vmatprep.subr.bf16.mxu0 0
  %90 = vmatpush1.bf16.msra.mxu0 %v73
  %91 = vmatprep.subr.bf16.mxu0 0
  %92 = vmatpush1.bf16.msra.mxu0 %v74
  %93 = vmatprep.subr.bf16.mxu0 0
  %94 = vmatpush1.bf16.msra.mxu0 %v75
  %95 = vmatprep.subr.bf16.mxu0 0
  %96 = vmatpush1.bf16.msra.mxu0 %v76
  %97 = vmatprep.subr.bf16.mxu0 0
  %98 = vmatpush1.bf16.msra.mxu0 %v77
  %99 = vmatprep.subr.bf16.mxu0 0
  %100 = vmatpush1.bf16.msra.mxu0 %v78
  %101 = vmatprep.subr.bf16.mxu0 0
  %102 = vmatpush1.bf16.msra.mxu0 %v79
  %103 = vmatprep.subr.bf16.mxu0 0
  %104 = vmatpush1.bf16.msra.mxu0 %v80
  %105 = vmatprep.subr.bf16.mxu0 0
  %106 = vmatpush1.bf16.msra.mxu0 0
  %107 = vmatprep.subr.bf16.mxu0 0
  %108 = vmatpush1.bf16.msra.mxu0 0
  %109 = vmatprep.subr.bf16.mxu0 0
  %110 = vmatpush1.bf16.msra.mxu0 0
  %111 = vmatprep.subr.bf16.mxu0 0
  %112 = vmatpush1.bf16.msra.mxu0 0
  %113 = vmatprep.subr.bf16.mxu0 0
  %114 = vmatpush1.bf16.msra.mxu0 0
  %115 = vmatprep.subr.bf16.mxu0 0
  %116 = vmatpush1.bf16.msra.mxu0 0
  %117 = vmatprep.subr.bf16.mxu0 0
  %118 = vmatpush1.bf16.msra.mxu0 0
  %119 = vmatprep.subr.bf16.mxu0 0
  %120 = vmatpush1.bf16.msra.mxu0 0
  %121 = vmatprep.mubr.bf16.mxu0 0
  %122 = vmatmul.mubr.bf16.gmra.mrb[0].mxu0 %v17
  %v123 = vpop.f32.mrb[0].mxu0
  %v124 = vadd.f32 %v39, %v123
  %v125 = vpop.f32.mrb[0].mxu0
  %v126 = vpop.f32.mrb[0].mxu0
  %v127 = vadd.f32 %v39, %v126
  %v128 = vpop.f32.mrb[0].mxu0
  %129 = vdwg.mxu0
  %130 = vst [vmem:[%s3] sm:$0xff] %v124
  %131 = vst [vmem:[%s3 + $0x8] sm:$0xff] %v127
  // Predicated region
  $region14: #{textrnn_forward.3} parent=0 // pred_check
    _
  $region15: #{textrnn_forward.3} parent=0 // pred_check_branch
    %133 = sbr.rel (0) target = $region17
  $region16: #{textrnn_forward.3} parent=0 // pred_region
    _
  $region17: #{textrnn_forward.3} parent=0 // pred_fallthru
    _
  // Predicated region
  $region18: #{textrnn_forward.3} parent=0 // pred_check
    _
  $region19: #{textrnn_forward.3} parent=0 // pred_check_branch
    %135 = sbr.rel (0) target = $region21
  $region20: #{textrnn_forward.3} parent=0 // pred_region
    _
  $region21: #{textrnn_forward.3} parent=0 // pred_fallthru
    _

// kernel: textrnn_forward.2
$region0: #{textrnn_forward.2}
  #allocation0 [shape = 'u32[]', space=smem, size = 0x4, offset = 0x4, fixed_abs, tag = 'smem constant byte address 0x4 - core index']
  #allocation1 [shape = 'u32[144,128]{1,0:T(1,128)}', space=vmem, size = 0x12000, scoped, tag = 'internal scratch']
  %s0 = inlined_call_operand.vmem [shape: bf16[8,16,128], index: 0, kind: input, shape index: {}]
  %s1 = inlined_call_operand.vmem [shape: bf16[256,128], index: 1, kind: input, shape index: {}]
  %s2 = inlined_call_operand.vmem [shape: f32[1,128], index: 2, kind: input, shape index: {}]
  %s3 = inlined_call_operand.vmem [shape: f32[16,128], index: 3, kind: output, shape index: {}]
  %s4 = sld [smem:[#allocation0]]
  $region26: #{textrnn_forward.2} parent=0
    _
  %s6 = ssub.s32 1, %s4
  %s7 = scalar_select 0, %s6, %s4
  // Predicated region
  $region2: #{textrnn_forward.2} parent=0 // pred_check
    _
  $region3: #{textrnn_forward.2} parent=0 // pred_check_branch
    %9 = sbr.rel (0) target = $region5
  $region4: #{textrnn_forward.2} parent=0 // pred_region
    _
  $region5: #{textrnn_forward.2} parent=0 // pred_fallthru
    _
  // Predicated region
  $region6: #{textrnn_forward.2} parent=0 // pred_check
    _
  $region7: #{textrnn_forward.2} parent=0 // pred_check_branch
    %11 = sbr.rel (0) target = $region9
  $region8: #{textrnn_forward.2} parent=0 // pred_region
    _
  $region9: #{textrnn_forward.2} parent=0 // pred_fallthru
    _
  // Predicated region
  $region10: #{textrnn_forward.2} parent=0 // pred_check
    _
  $region11: #{textrnn_forward.2} parent=0 // pred_check_branch
    %13 = sbr.rel (0) target = $region13
  $region12: #{textrnn_forward.2} parent=0 // pred_region
    _
  $region13: #{textrnn_forward.2} parent=0 // pred_fallthru
    _
  %p15 = scmp.eq.s32.totalorder 0, 0
  // Predicated region
  $region14: #{textrnn_forward.2} parent=0 // pred_check
    %p16 = pneg %p15
  $region15: #{textrnn_forward.2} parent=0 // pred_check_branch
    %18 = sbr.rel (%p16) target = $region17
  $region16: #{textrnn_forward.2} parent=0 // pred_region
    %19 = vst [vmem:[%s3] sm:$0xff] 0.0
    %20 = vst [vmem:[%s3 + $0x8] sm:$0xff] 0.0
  $region17: #{textrnn_forward.2} parent=0 // pred_fallthru
    _
  %v21 = vld [vmem:[%s3] sm:$0xff]
  %v22 = vld [vmem:[%s3 + $0x8] sm:$0xff]
  %v23 = vld [vmem:[%s2] sm:$0x1]
  %s24 = smul.u32 0, 8
  %v25 = vld [vmem:[%s0] sm:$0xf]
  %v26 = vld [vmem:[%s0 + $0x4] sm:$0xf]
  %v27 = vpack.c.bf16 %v22, %v21
  %v30 = vunpack.c.l.b16 %v25
  %v31 = vunpack.c.l.b16 %v26
  %v32 = vpack.c.b16 %v31, %v30
  %v34 = vld [vmem:[%s1] sm:$0xf]
  %v35 = vld [vmem:[%s1 + $0x4] sm:$0xf]
  %v36 = vld [vmem:[%s1 + $0x8] sm:$0xf]
  %v37 = vld [vmem:[%s1 + $0xc] sm:$0xf]
  %v38 = vld [vmem:[%s1 + $0x10] sm:$0xf]
  %v39 = vld [vmem:[%s1 + $0x14] sm:$0xf]
  %v40 = vld [vmem:[%s1 + $0x18] sm:$0xf]
  %v41 = vld [vmem:[%s1 + $0x1c] sm:$0xf]
  %v42 = vld [vmem:[%s1 + $0x20] sm:$0xf]
  %v43 = vld [vmem:[%s1 + $0x24] sm:$0xf]
  %v44 = vld [vmem:[%s1 + $0x28] sm:$0xf]
  %v45 = vld [vmem:[%s1 + $0x2c] sm:$0xf]
  %v46 = vld [vmem:[%s1 + $0x30] sm:$0xf]
  %v47 = vld [vmem:[%s1 + $0x34] sm:$0xf]
  %v48 = vld [vmem:[%s1 + $0x38] sm:$0xf]
  %v49 = vld [vmem:[%s1 + $0x3c] sm:$0xf]
  %v50 = vld [vmem:[%s1 + $0x40] sm:$0xf]
  %v51 = vld [vmem:[%s1 + $0x44] sm:$0xf]
  %v52 = vld [vmem:[%s1 + $0x48] sm:$0xf]
  %v53 = vld [vmem:[%s1 + $0x4c] sm:$0xf]
  %v54 = vld [vmem:[%s1 + $0x50] sm:$0xf]
  %v55 = vld [vmem:[%s1 + $0x54] sm:$0xf]
  %v56 = vld [vmem:[%s1 + $0x58] sm:$0xf]
  %v57 = vld [vmem:[%s1 + $0x5c] sm:$0xf]
  %v58 = vld [vmem:[%s1 + $0x60] sm:$0xf]
  %v59 = vld [vmem:[%s1 + $0x64] sm:$0xf]
  %v60 = vld [vmem:[%s1 + $0x68] sm:$0xf]
  %v61 = vld [vmem:[%s1 + $0x6c] sm:$0xf]
  %v62 = vld [vmem:[%s1 + $0x70] sm:$0xf]
  %v63 = vld [vmem:[%s1 + $0x74] sm:$0xf]
  %v64 = vld [vmem:[%s1 + $0x78] sm:$0xf]
  %v65 = vld [vmem:[%s1 + $0x7c] sm:$0xf]
  %v67 = vlaneseq
  %v68 = vshrl.u32 %v67, 7
  %v69 = vsub.s32 0, %v68
  %v70 = vrot.slane %v23, %v69
  %v104 = vunpack.c.l.b16 %v34
  %v105 = vunpack.c.l.b16 %v35
  %v106 = vunpack.c.l.b16 %v36
  %v107 = vunpack.c.l.b16 %v37
  %v108 = vunpack.c.l.b16 %v38
  %v109 = vunpack.c.l.b16 %v39
  %v110 = vunpack.c.l.b16 %v40
  %v111 = vunpack.c.l.b16 %v41
  %v112 = vunpack.c.l.b16 %v42
  %v113 = vunpack.c.l.b16 %v43
  %v114 = vunpack.c.l.b16 %v44
  %v115 = vunpack.c.l.b16 %v45
  %v116 = vunpack.c.l.b16 %v46
  %v117 = vunpack.c.l.b16 %v47
  %v118 = vunpack.c.l.b16 %v48
  %v119 = vunpack.c.l.b16 %v49
  %v120 = vunpack.c.l.b16 %v50
  %v121 = vunpack.c.l.b16 %v51
  %v122 = vunpack.c.l.b16 %v52
  %v123 = vunpack.c.l.b16 %v53
  %v124 = vunpack.c.l.b16 %v54
  %v125 = vunpack.c.l.b16 %v55
  %v126 = vunpack.c.l.b16 %v56
  %v127 = vunpack.c.l.b16 %v57
  %v128 = vunpack.c.l.b16 %v58
  %v129 = vunpack.c.l.b16 %v59
  %v130 = vunpack.c.l.b16 %v60
  %v131 = vunpack.c.l.b16 %v61
  %v132 = vunpack.c.l.b16 %v62
  %v133 = vunpack.c.l.b16 %v63
  %v134 = vunpack.c.l.b16 %v64
  %v135 = vunpack.c.l.b16 %v65
  %v136 = vpack.c.b16 %v105, %v104
  %v137 = vpack.c.b16 %v107, %v106
  %v138 = vpack.c.b16 %v109, %v108
  %v139 = vpack.c.b16 %v111, %v110
  %v140 = vpack.c.b16 %v113, %v112
  %v141 = vpack.c.b16 %v115, %v114
  %v142 = vpack.c.b16 %v117, %v116
  %v143 = vpack.c.b16 %v119, %v118
  %v144 = vpack.c.b16 %v121, %v120
  %v145 = vpack.c.b16 %v123, %v122
  %v146 = vpack.c.b16 %v125, %v124
  %v147 = vpack.c.b16 %v127, %v126
  %v148 = vpack.c.b16 %v129, %v128
  %v149 = vpack.c.b16 %v131, %v130
  %v150 = vpack.c.b16 %v133, %v132
  %v151 = vpack.c.b16 %v135, %v134
  %168 = vmatprep.subr.bf16.mxu0 0
  %169 = vmatpush1.bf16.msra.mxu0 %v136
  %170 = vmatprep.subr.bf16.mxu0 0
  %171 = vmatpush1.bf16.msra.mxu0 %v137
  %172 = vmatprep.subr.bf16.mxu0 0
  %173 = vmatpush1.bf16.msra.mxu0 %v138
  %174 = vmatprep.subr.bf16.mxu0 0
  %175 = vmatpush1.bf16.msra.mxu0 %v139
  %176 = vmatprep.subr.bf16.mxu0 0
  %177 = vmatpush1.bf16.msra.mxu0 %v140
  %178 = vmatprep.subr.bf16.mxu0 0
  %179 = vmatpush1.bf16.msra.mxu0 %v141
  %180 = vmatprep.subr.bf16.mxu0 0
  %181 = vmatpush1.bf16.msra.mxu0 %v142
  %182 = vmatprep.subr.bf16.mxu0 0
  %183 = vmatpush1.bf16.msra.mxu0 %v143
  %184 = vmatprep.subr.bf16.mxu0 0
  %185 = vmatpush1.bf16.msra.mxu0 %v144
  %186 = vmatprep.subr.bf16.mxu0 0
  %187 = vmatpush1.bf16.msra.mxu0 %v145
  %188 = vmatprep.subr.bf16.mxu0 0
  %189 = vmatpush1.bf16.msra.mxu0 %v146
  %190 = vmatprep.subr.bf16.mxu0 0
  %191 = vmatpush1.bf16.msra.mxu0 %v147
  %192 = vmatprep.subr.bf16.mxu0 0
  %193 = vmatpush1.bf16.msra.mxu0 %v148
  %194 = vmatprep.subr.bf16.mxu0 0
  %195 = vmatpush1.bf16.msra.mxu0 %v149
  %196 = vmatprep.subr.bf16.mxu0 0
  %197 = vmatpush1.bf16.msra.mxu0 %v150
  %198 = vmatprep.subr.bf16.mxu0 0
  %199 = vmatpush1.bf16.msra.mxu0 %v151
  %200 = vmatprep.mubr.bf16.mxu0 %v27
  %201 = vmatmul.mubr.bf16.gmra.mrb[0].mxu0 %v32
  %v202 = vpop.f32.mrb[0].mxu0
  %v203 = vadd.f32 %v70, %v202
  %v204 = vpop.f32.mrb[0].mxu0
  %v205 = vpop.f32.mrb[0].mxu0
  %v206 = vadd.f32 %v70, %v205
  %v207 = vpop.f32.mrb[0].mxu0
  %208 = vdwg.mxu0
  %v209 = vtanh.pop %v203
  %v210 = vtanh.pop %v206
  %p211 = scmp.lt.s32.totalorder %s24, 8
  %s212 = scalar_select %p211, 1, 0
  %v213 = vstv %s212
  %vm214 = vcmp.eq.s32.totalorder %v213, 1
  %v215 = vsel %vm214, %v209, %v21
  %v216 = vsel %vm214, %v210, %v22
  %s217 = scalar_lea.vmem %s0, 8
  %v218 = vld [vmem:[%s217] sm:$0xf]
  %v219 = vld [vmem:[%s217 + $0x4] sm:$0xf]
  %v220 = vpack.c.bf16 %v216, %v215
  %v223 = vunpack.c.l.b16 %v218
  %v224 = vunpack.c.l.b16 %v219
  %v225 = vpack.c.b16 %v224, %v223
  %227 = vmatprep.subr.bf16.mxu0 0
  %228 = vmatpush1.bf16.msra.mxu0 %v136
  %229 = vmatprep.subr.bf16.mxu0 0
  %230 = vmatpush1.bf16.msra.mxu0 %v137
  %231 = vmatprep.subr.bf16.mxu0 0
  %232 = vmatpush1.bf16.msra.mxu0 %v138
  %233 = vmatprep.subr.bf16.mxu0 0
  %234 = vmatpush1.bf16.msra.mxu0 %v139
  %235 = vmatprep.subr.bf16.mxu0 0
  %236 = vmatpush1.bf16.msra.mxu0 %v140
  %237 = vmatprep.subr.bf16.mxu0 0
  %238 = vmatpush1.bf16.msra.mxu0 %v141
  %239 = vmatprep.subr.bf16.mxu0 0
  %240 = vmatpush1.bf16.msra.mxu0 %v142
  %241 = vmatprep.subr.bf16.mxu0 0
  %242 = vmatpush1.bf16.msra.mxu0 %v143
  %243 = vmatprep.subr.bf16.mxu0 0
  %244 = vmatpush1.bf16.msra.mxu0 %v144
  %245 = vmatprep.subr.bf16.mxu0 0
  %246 = vmatpush1.bf16.msra.mxu0 %v145
  %247 = vmatprep.subr.bf16.mxu0 0
  %248 = vmatpush1.bf16.msra.mxu0 %v146
  %249 = vmatprep.subr.bf16.mxu0 0
  %250 = vmatpush1.bf16.msra.mxu0 %v147
  %251 = vmatprep.subr.bf16.mxu0 0
  %252 = vmatpush1.bf16.msra.mxu0 %v148
  %253 = vmatprep.subr.bf16.mxu0 0
  %254 = vmatpush1.bf16.msra.mxu0 %v149
  %255 = vmatprep.subr.bf16.mxu0 0
  %256 = vmatpush1.bf16.msra.mxu0 %v150
  %257 = vmatprep.subr.bf16.mxu0 0
  %258 = vmatpush1.bf16.msra.mxu0 %v151
  %259 = vmatprep.mubr.bf16.mxu0 %v220
  %260 = vmatmul.mubr.bf16.gmra.mrb[0].mxu0 %v225
  %v261 = vpop.f32.mrb[0].mxu0
  %v262 = vadd.f32 %v70, %v261
  %v263 = vpop.f32.mrb[0].mxu0
  %v264 = vpop.f32.mrb[0].mxu0
  %v265 = vadd.f32 %v70, %v264
  %v266 = vpop.f32.mrb[0].mxu0
  %267 = vdwg.mxu0
  %v268 = vtanh.pop %v262
  %v269 = vtanh.pop %v265
  %s270 = sadd.s32 %s24, 1
  %p271 = scmp.lt.s32.totalorder %s270, 8
  %s272 = scalar_select %p271, 1, 0
  %v273 = vstv %s272
  %vm274 = vcmp.eq.s32.totalorder %v273, 1
  %v275 = vsel %vm274, %v268, %v215
  %v276 = vsel %vm274, %v269, %v216
  %s277 = scalar_lea.vmem %s0, 16
  %v278 = vld [vmem:[%s277] sm:$0xf]
  %v279 = vld [vmem:[%s277 + $0x4] sm:$0xf]
  %v280 = vpack.c.bf16 %v276, %v275
  %v283 = vunpack.c.l.b16 %v278
  %v284 = vunpack.c.l.b16 %v279
  %v285 = vpack.c.b16 %v284, %v283
  %287 = vmatprep.subr.bf16.mxu0 0
  %288 = vmatpush1.bf16.msra.mxu0 %v136
  %289 = vmatprep.subr.bf16.mxu0 0
  %290 = vmatpush1.bf16.msra.mxu0 %v137
  %291 = vmatprep.subr.bf16.mxu0 0
  %292 = vmatpush1.bf16.msra.mxu0 %v138
  %293 = vmatprep.subr.bf16.mxu0 0
  %294 = vmatpush1.bf16.msra.mxu0 %v139
  %295 = vmatprep.subr.bf16.mxu0 0
  %296 = vmatpush1.bf16.msra.mxu0 %v140
  %297 = vmatprep.subr.bf16.mxu0 0
  %298 = vmatpush1.bf16.msra.mxu0 %v141
  %299 = vmatprep.subr.bf16.mxu0 0
  %300 = vmatpush1.bf16.msra.mxu0 %v142
  %301 = vmatprep.subr.bf16.mxu0 0
  %302 = vmatpush1.bf16.msra.mxu0 %v143
  %303 = vmatprep.subr.bf16.mxu0 0
  %304 = vmatpush1.bf16.msra.mxu0 %v144
  %305 = vmatprep.subr.bf16.mxu0 0
  %306 = vmatpush1.bf16.msra.mxu0 %v145
  %307 = vmatprep.subr.bf16.mxu0 0
  %308 = vmatpush1.bf16.msra.mxu0 %v146
  %309 = vmatprep.subr.bf16.mxu0 0
  %310 = vmatpush1.bf16.msra.mxu0 %v147
  %311 = vmatprep.subr.bf16.mxu0 0
  %312 = vmatpush1.bf16.msra.mxu0 %v148
  %313 = vmatprep.subr.bf16.mxu0 0
  %314 = vmatpush1.bf16.msra.mxu0 %v149
  %315 = vmatprep.subr.bf16.mxu0 0
  %316 = vmatpush1.bf16.msra.mxu0 %v150
  %317 = vmatprep.subr.bf16.mxu0 0
  %318 = vmatpush1.bf16.msra.mxu0 %v151
  %319 = vmatprep.mubr.bf16.mxu0 %v280
  %320 = vmatmul.mubr.bf16.gmra.mrb[0].mxu0 %v285
  %v321 = vpop.f32.mrb[0].mxu0
  %v322 = vadd.f32 %v70, %v321
  %v323 = vpop.f32.mrb[0].mxu0
  %v324 = vpop.f32.mrb[0].mxu0
  %v325 = vadd.f32 %v70, %v324
  %v326 = vpop.f32.mrb[0].mxu0
  %327 = vdwg.mxu0
  %v328 = vtanh.pop %v322
  %v329 = vtanh.pop %v325
  %s330 = sadd.s32 %s24, 2
  %p331 = scmp.lt.s32.totalorder %s330, 8
  %s332 = scalar_select %p331, 1, 0
  %v333 = vstv %s332
  %vm334 = vcmp.eq.s32.totalorder %v333, 1
  %v335 = vsel %vm334, %v328, %v275
  %v336 = vsel %vm334, %v329, %v276
  %s337 = scalar_lea.vmem %s0, 24
  %v338 = vld [vmem:[%s337] sm:$0xf]
  %v339 = vld [vmem:[%s337 + $0x4] sm:$0xf]
  %v340 = vpack.c.bf16 %v336, %v335
  %v343 = vunpack.c.l.b16 %v338
  %v344 = vunpack.c.l.b16 %v339
  %v345 = vpack.c.b16 %v344, %v343
  %347 = vmatprep.subr.bf16.mxu0 0
  %348 = vmatpush1.bf16.msra.mxu0 %v136
  %349 = vmatprep.subr.bf16.mxu0 0
  %350 = vmatpush1.bf16.msra.mxu0 %v137
  %351 = vmatprep.subr.bf16.mxu0 0
  %352 = vmatpush1.bf16.msra.mxu0 %v138
  %353 = vmatprep.subr.bf16.mxu0 0
  %354 = vmatpush1.bf16.msra.mxu0 %v139
  %355 = vmatprep.subr.bf16.mxu0 0
  %356 = vmatpush1.bf16.msra.mxu0 %v140
  %357 = vmatprep.subr.bf16.mxu0 0
  %358 = vmatpush1.bf16.msra.mxu0 %v141
  %359 = vmatprep.subr.bf16.mxu0 0
  %360 = vmatpush1.bf16.msra.mxu0 %v142
  %361 = vmatprep.subr.bf16.mxu0 0
  %362 = vmatpush1.bf16.msra.mxu0 %v143
  %363 = vmatprep.subr.bf16.mxu0 0
  %364 = vmatpush1.bf16.msra.mxu0 %v144
  %365 = vmatprep.subr.bf16.mxu0 0
  %366 = vmatpush1.bf16.msra.mxu0 %v145
  %367 = vmatprep.subr.bf16.mxu0 0
  %368 = vmatpush1.bf16.msra.mxu0 %v146
  %369 = vmatprep.subr.bf16.mxu0 0
  %370 = vmatpush1.bf16.msra.mxu0 %v147
  %371 = vmatprep.subr.bf16.mxu0 0
  %372 = vmatpush1.bf16.msra.mxu0 %v148
  %373 = vmatprep.subr.bf16.mxu0 0
  %374 = vmatpush1.bf16.msra.mxu0 %v149
  %375 = vmatprep.subr.bf16.mxu0 0
  %376 = vmatpush1.bf16.msra.mxu0 %v150
  %377 = vmatprep.subr.bf16.mxu0 0
  %378 = vmatpush1.bf16.msra.mxu0 %v151
  %379 = vmatprep.mubr.bf16.mxu0 %v340
  %380 = vmatmul.mubr.bf16.gmra.mrb[0].mxu0 %v345
  %v381 = vpop.f32.mrb[0].mxu0
  %v382 = vadd.f32 %v70, %v381
  %v383 = vpop.f32.mrb[0].mxu0
  %v384 = vpop.f32.mrb[0].mxu0
  %v385 = vadd.f32 %v70, %v384
  %v386 = vpop.f32.mrb[0].mxu0
  %387 = vdwg.mxu0
  %v388 = vtanh.pop %v382
  %v389 = vtanh.pop %v385
  %s390 = sadd.s32 %s24, 3
  %p391 = scmp.lt.s32.totalorder %s390, 8
  %s392 = scalar_select %p391, 1, 0
  %v393 = vstv %s392
  %vm394 = vcmp.eq.s32.totalorder %v393, 1
  %v395 = vsel %vm394, %v388, %v335
  %v396 = vsel %vm394, %v389, %v336
  %s397 = scalar_lea.vmem %s0, 32
  %v398 = vld [vmem:[%s397] sm:$0xf]
  %v399 = vld [vmem:[%s397 + $0x4] sm:$0xf]
  %v400 = vpack.c.bf16 %v396, %v395
  %v403 = vunpack.c.l.b16 %v398
  %v404 = vunpack.c.l.b16 %v399
  %v405 = vpack.c.b16 %v404, %v403
  %407 = vmatprep.subr.bf16.mxu0 0
  %408 = vmatpush1.bf16.msra.mxu0 %v136
  %409 = vmatprep.subr.bf16.mxu0 0
  %410 = vmatpush1.bf16.msra.mxu0 %v137
  %411 = vmatprep.subr.bf16.mxu0 0
  %412 = vmatpush1.bf16.msra.mxu0 %v138
  %413 = vmatprep.subr.bf16.mxu0 0
  %414 = vmatpush1.bf16.msra.mxu0 %v139
  %415 = vmatprep.subr.bf16.mxu0 0
  %416 = vmatpush1.bf16.msra.mxu0 %v140
  %417 = vmatprep.subr.bf16.mxu0 0
  %418 = vmatpush1.bf16.msra.mxu0 %v141
  %419 = vmatprep.subr.bf16.mxu0 0
  %420 = vmatpush1.bf16.msra.mxu0 %v142
  %421 = vmatprep.subr.bf16.mxu0 0
  %422 = vmatpush1.bf16.msra.mxu0 %v143
  %423 = vmatprep.subr.bf16.mxu0 0
  %424 = vmatpush1.bf16.msra.mxu0 %v144
  %425 = vmatprep.subr.bf16.mxu0 0
  %426 = vmatpush1.bf16.msra.mxu0 %v145
  %427 = vmatprep.subr.bf16.mxu0 0
  %428 = vmatpush1.bf16.msra.mxu0 %v146
  %429 = vmatprep.subr.bf16.mxu0 0
  %430 = vmatpush1.bf16.msra.mxu0 %v147
  %431 = vmatprep.subr.bf16.mxu0 0
  %432 = vmatpush1.bf16.msra.mxu0 %v148
  %433 = vmatprep.subr.bf16.mxu0 0
  %434 = vmatpush1.bf16.msra.mxu0 %v149
  %435 = vmatprep.subr.bf16.mxu0 0
  %436 = vmatpush1.bf16.msra.mxu0 %v150
  %437 = vmatprep.subr.bf16.mxu0 0
  %438 = vmatpush1.bf16.msra.mxu0 %v151
  %439 = vmatprep.mubr.bf16.mxu0 %v400
  %440 = vmatmul.mubr.bf16.gmra.mrb[0].mxu0 %v405
  %v441 = vpop.f32.mrb[0].mxu0
  %v442 = vadd.f32 %v70, %v441
  %v443 = vpop.f32.mrb[0].mxu0
  %v444 = vpop.f32.mrb[0].mxu0
  %v445 = vadd.f32 %v70, %v444
  %v446 = vpop.f32.mrb[0].mxu0
  %447 = vdwg.mxu0
  %v448 = vtanh.pop %v442
  %v449 = vtanh.pop %v445
  %s450 = sadd.s32 %s24, 4
  %p451 = scmp.lt.s32.totalorder %s450, 8
  %s452 = scalar_select %p451, 1, 0
  %v453 = vstv %s452
  %vm454 = vcmp.eq.s32.totalorder %v453, 1
  %v455 = vsel %vm454, %v448, %v395
  %v456 = vsel %vm454, %v449, %v396
  %s457 = scalar_lea.vmem %s0, 40
  %v458 = vld [vmem:[%s457] sm:$0xf]
  %v459 = vld [vmem:[%s457 + $0x4] sm:$0xf]
  %v460 = vpack.c.bf16 %v456, %v455
  %v463 = vunpack.c.l.b16 %v458
  %v464 = vunpack.c.l.b16 %v459
  %v465 = vpack.c.b16 %v464, %v463
  %467 = vmatprep.subr.bf16.mxu0 0
  %468 = vmatpush1.bf16.msra.mxu0 %v136
  %469 = vmatprep.subr.bf16.mxu0 0
  %470 = vmatpush1.bf16.msra.mxu0 %v137
  %471 = vmatprep.subr.bf16.mxu0 0
  %472 = vmatpush1.bf16.msra.mxu0 %v138
  %473 = vmatprep.subr.bf16.mxu0 0
  %474 = vmatpush1.bf16.msra.mxu0 %v139
  %475 = vmatprep.subr.bf16.mxu0 0
  %476 = vmatpush1.bf16.msra.mxu0 %v140
  %477 = vmatprep.subr.bf16.mxu0 0
  %478 = vmatpush1.bf16.msra.mxu0 %v141
  %479 = vmatprep.subr.bf16.mxu0 0
  %480 = vmatpush1.bf16.msra.mxu0 %v142
  %481 = vmatprep.subr.bf16.mxu0 0
  %482 = vmatpush1.bf16.msra.mxu0 %v143
  %483 = vmatprep.subr.bf16.mxu0 0
  %484 = vmatpush1.bf16.msra.mxu0 %v144
  %485 = vmatprep.subr.bf16.mxu0 0
  %486 = vmatpush1.bf16.msra.mxu0 %v145
  %487 = vmatprep.subr.bf16.mxu0 0
  %488 = vmatpush1.bf16.msra.mxu0 %v146
  %489 = vmatprep.subr.bf16.mxu0 0
  %490 = vmatpush1.bf16.msra.mxu0 %v147
  %491 = vmatprep.subr.bf16.mxu0 0
  %492 = vmatpush1.bf16.msra.mxu0 %v148
  %493 = vmatprep.subr.bf16.mxu0 0
  %494 = vmatpush1.bf16.msra.mxu0 %v149
  %495 = vmatprep.subr.bf16.mxu0 0
  %496 = vmatpush1.bf16.msra.mxu0 %v150
  %497 = vmatprep.subr.bf16.mxu0 0
  %498 = vmatpush1.bf16.msra.mxu0 %v151
  %499 = vmatprep.mubr.bf16.mxu0 %v460
  %500 = vmatmul.mubr.bf16.gmra.mrb[0].mxu0 %v465
  %v501 = vpop.f32.mrb[0].mxu0
  %v502 = vadd.f32 %v70, %v501
  %v503 = vpop.f32.mrb[0].mxu0
  %v504 = vpop.f32.mrb[0].mxu0
  %v505 = vadd.f32 %v70, %v504
  %v506 = vpop.f32.mrb[0].mxu0
  %507 = vdwg.mxu0
  %v508 = vtanh.pop %v502
  %v509 = vtanh.pop %v505
  %s510 = sadd.s32 %s24, 5
  %p511 = scmp.lt.s32.totalorder %s510, 8
  %s512 = scalar_select %p511, 1, 0
  %v513 = vstv %s512
  %vm514 = vcmp.eq.s32.totalorder %v513, 1
  %v515 = vsel %vm514, %v508, %v455
  %v516 = vsel %vm514, %v509, %v456
  %s517 = scalar_lea.vmem %s0, 48
  %v518 = vld [vmem:[%s517] sm:$0xf]
  %v519 = vld [vmem:[%s517 + $0x4] sm:$0xf]
  %v520 = vpack.c.bf16 %v516, %v515
  %v523 = vunpack.c.l.b16 %v518
  %v524 = vunpack.c.l.b16 %v519
  %v525 = vpack.c.b16 %v524, %v523
  %527 = vmatprep.subr.bf16.mxu0 0
  %528 = vmatpush1.bf16.msra.mxu0 %v136
  %529 = vmatprep.subr.bf16.mxu0 0
  %530 = vmatpush1.bf16.msra.mxu0 %v137
  %531 = vmatprep.subr.bf16.mxu0 0
  %532 = vmatpush1.bf16.msra.mxu0 %v138
  %533 = vmatprep.subr.bf16.mxu0 0
  %534 = vmatpush1.bf16.msra.mxu0 %v139
  %535 = vmatprep.subr.bf16.mxu0 0
  %536 = vmatpush1.bf16.msra.mxu0 %v140
  %537 = vmatprep.subr.bf16.mxu0 0
  %538 = vmatpush1.bf16.msra.mxu0 %v141
  %539 = vmatprep.subr.bf16.mxu0 0
  %540 = vmatpush1.bf16.msra.mxu0 %v142
  %541 = vmatprep.subr.bf16.mxu0 0
  %542 = vmatpush1.bf16.msra.mxu0 %v143
  %543 = vmatprep.subr.bf16.mxu0 0
  %544 = vmatpush1.bf16.msra.mxu0 %v144
  %545 = vmatprep.subr.bf16.mxu0 0
  %546 = vmatpush1.bf16.msra.mxu0 %v145
  %547 = vmatprep.subr.bf16.mxu0 0
  %548 = vmatpush1.bf16.msra.mxu0 %v146
  %549 = vmatprep.subr.bf16.mxu0 0
  %550 = vmatpush1.bf16.msra.mxu0 %v147
  %551 = vmatprep.subr.bf16.mxu0 0
  %552 = vmatpush1.bf16.msra.mxu0 %v148
  %553 = vmatprep.subr.bf16.mxu0 0
  %554 = vmatpush1.bf16.msra.mxu0 %v149
  %555 = vmatprep.subr.bf16.mxu0 0
  %556 = vmatpush1.bf16.msra.mxu0 %v150
  %557 = vmatprep.subr.bf16.mxu0 0
  %558 = vmatpush1.bf16.msra.mxu0 %v151
  %559 = vmatprep.mubr.bf16.mxu0 %v520
  %560 = vmatmul.mubr.bf16.gmra.mrb[0].mxu0 %v525
  %v561 = vpop.f32.mrb[0].mxu0
  %v562 = vadd.f32 %v70, %v561
  %v563 = vpop.f32.mrb[0].mxu0
  %v564 = vpop.f32.mrb[0].mxu0
  %v565 = vadd.f32 %v70, %v564
  %v566 = vpop.f32.mrb[0].mxu0
  %567 = vdwg.mxu0
  %v568 = vtanh.pop %v562
  %v569 = vtanh.pop %v565
  %s570 = sadd.s32 %s24, 6
  %p571 = scmp.lt.s32.totalorder %s570, 8
  %s572 = scalar_select %p571, 1, 0
  %v573 = vstv %s572
  %vm574 = vcmp.eq.s32.totalorder %v573, 1
  %v575 = vsel %vm574, %v568, %v515
  %v576 = vsel %vm574, %v569, %v516
  %s577 = scalar_lea.vmem %s0, 56
  %v578 = vld [vmem:[%s577] sm:$0xf]
  %v579 = vld [vmem:[%s577 + $0x4] sm:$0xf]
  %v580 = vpack.c.bf16 %v576, %v575
  %v583 = vunpack.c.l.b16 %v578
  %v584 = vunpack.c.l.b16 %v579
  %v585 = vpack.c.b16 %v584, %v583
  %587 = vmatprep.subr.bf16.mxu0 0
  %588 = vmatpush1.bf16.msra.mxu0 %v136
  %589 = vmatprep.subr.bf16.mxu0 0
  %590 = vmatpush1.bf16.msra.mxu0 %v137
  %591 = vmatprep.subr.bf16.mxu0 0
  %592 = vmatpush1.bf16.msra.mxu0 %v138
  %593 = vmatprep.subr.bf16.mxu0 0
  %594 = vmatpush1.bf16.msra.mxu0 %v139
  %595 = vmatprep.subr.bf16.mxu0 0
  %596 = vmatpush1.bf16.msra.mxu0 %v140
  %597 = vmatprep.subr.bf16.mxu0 0
  %598 = vmatpush1.bf16.msra.mxu0 %v141
  %599 = vmatprep.subr.bf16.mxu0 0
  %600 = vmatpush1.bf16.msra.mxu0 %v142
  %601 = vmatprep.subr.bf16.mxu0 0
  %602 = vmatpush1.bf16.msra.mxu0 %v143
  %603 = vmatprep.subr.bf16.mxu0 0
  %604 = vmatpush1.bf16.msra.mxu0 %v144
  %605 = vmatprep.subr.bf16.mxu0 0
  %606 = vmatpush1.bf16.msra.mxu0 %v145
  %607 = vmatprep.subr.bf16.mxu0 0
  %608 = vmatpush1.bf16.msra.mxu0 %v146
  %609 = vmatprep.subr.bf16.mxu0 0
  %610 = vmatpush1.bf16.msra.mxu0 %v147
  %611 = vmatprep.subr.bf16.mxu0 0
  %612 = vmatpush1.bf16.msra.mxu0 %v148
  %613 = vmatprep.subr.bf16.mxu0 0
  %614 = vmatpush1.bf16.msra.mxu0 %v149
  %615 = vmatprep.subr.bf16.mxu0 0
  %616 = vmatpush1.bf16.msra.mxu0 %v150
  %617 = vmatprep.subr.bf16.mxu0 0
  %618 = vmatpush1.bf16.msra.mxu0 %v151
  %619 = vmatprep.mubr.bf16.mxu0 %v580
  %620 = vmatmul.mubr.bf16.gmra.mrb[0].mxu0 %v585
  %v621 = vpop.f32.mrb[0].mxu0
  %v622 = vadd.f32 %v70, %v621
  %v623 = vpop.f32.mrb[0].mxu0
  %v624 = vpop.f32.mrb[0].mxu0
  %v625 = vadd.f32 %v70, %v624
  %v626 = vpop.f32.mrb[0].mxu0
  %627 = vdwg.mxu0
  %v628 = vtanh.pop %v622
  %v629 = vtanh.pop %v625
  %s630 = sadd.s32 %s24, 7
  %p631 = scmp.lt.s32.totalorder %s630, 8
  %s632 = scalar_select %p631, 1, 0
  %v633 = vstv %s632
  %vm634 = vcmp.eq.s32.totalorder %v633, 1
  %v635 = vsel %vm634, %v628, %v575
  %v636 = vsel %vm634, %v629, %v576
  %637 = vst [vmem:[%s3] sm:$0xff] %v635
  %638 = vst [vmem:[%s3 + $0x8] sm:$0xff] %v636
  // Predicated region
  $region18: #{textrnn_forward.2} parent=0 // pred_check
    _
  $region19: #{textrnn_forward.2} parent=0 // pred_check_branch
    %640 = sbr.rel (0) target = $region21
  $region20: #{textrnn_forward.2} parent=0 // pred_region
    _
  $region21: #{textrnn_forward.2} parent=0 // pred_fallthru
    _
  // Predicated region
  $region22: #{textrnn_forward.2} parent=0 // pred_check
    _
  $region23: #{textrnn_forward.2} parent=0 // pred_check_branch
    %642 = sbr.rel (0) target = $region25
  $region24: #{textrnn_forward.2} parent=0 // pred_region
    _
  $region25: #{textrnn_forward.2} parent=0 // pred_fallthru
    _

</llo_original>
